<compile_context>
chip_gen: v7x
topology: tpu7x:2x2x1
jax: 0.10.0
libtpu: 0.0.40
codegen_flags: <defaults>
</compile_context>

<pallas_src>
import functools

import jax
import jax.numpy as jnp
from jax import lax
from jax.experimental import pallas as pl
from jax.experimental.pallas import tpu as pltpu


def _choose_tiles(rows, hw):
    """Pick (tile_r, tile_hw) so each input block is ~<=2 MiB of f32."""
    LANE, SUB = 128, 8
    max_block_elems = 512 * 1024          # 2 MiB at f32 (1 MiB at bf16)
    max_hw = 512 * LANE                    # 65536 lanes per hw tile
    tile_hw = hw if hw <= max_hw else max_hw
    if rows < SUB:
        tile_r = rows                      # block equals full row dim (< 8 rows)
    else:
        budget_r = max(SUB, (max_block_elems // tile_hw) // SUB * SUB)
        tile_r = max(SUB, min(budget_r, (rows // SUB) * SUB, 512))
    return tile_r, tile_hw


def _dice_bce_kernel(x_ref, t_ref, out_ref,
                     inter_ref, psum_ref, tsum_ref, bcer_ref, sums_ref,
                     *, rows, hw, tile_r, tile_hw, n_rt_pp, n_ht,
                     smooth, need_row_mask, need_col_mask):
    """Grid = (partition p, row-tile rt, hw-tile ht).

    x_ref, t_ref : (tile_r, tile_hw) input blocks (original dtype)
    out_ref      : (1, 8, 128) f32 partial sums for partition p
                   [0, 0, 0] = sum of BCE elements, [0, 1, 0] = sum of per-row dice
    inter/psum/tsum/bcer_ref : (tile_r, 1) f32 per-row accumulators across hw tiles
    sums_ref     : (8, 128) f32 running partial sums for this partition
    """
    p_id = pl.program_id(0)
    rt_id = pl.program_id(1)
    ht_id = pl.program_id(2)

    # ---- init per-partition accumulator at the first step of this partition ----
    @pl.when((rt_id == 0) & (ht_id == 0))
    def _():
        sums_ref[...] = jnp.zeros_like(sums_ref)

    # ---- init per-row accumulators at the first hw tile of each row tile ----
    @pl.when(ht_id == 0)
    def _():
        inter_ref[...] = jnp.zeros_like(inter_ref)
        psum_ref[...] = jnp.zeros_like(psum_ref)
        tsum_ref[...] = jnp.zeros_like(tsum_ref)
        bcer_ref[...] = jnp.zeros_like(bcer_ref)

    # ---- load + cast in-kernel (bf16 inputs halve HBM traffic) ----
    x = x_ref[...].astype(jnp.float32)
    t = t_ref[...].astype(jnp.float32)

    # Shared transcendental: e = exp(-|x|) feeds both the stable BCE term and
    # the sigmoid, so only one exp + one log per element hit the EUP.
    e = jnp.exp(-jnp.abs(x))
    bce = jnp.maximum(x, 0.0) - x * t + jnp.log1p(e)

    # sigmoid(x) = 1/(1+e) if x >= 0 else e/(1+e), via approx reciprocal + one
    # Newton step (near-exact, avoids a second exp and the full divide path).
    d = 1.0 + e
    inv = pl.reciprocal(d, approx=True)
    inv = inv * (2.0 - d * inv)
    prob = jnp.where(x >= 0.0, inv, e * inv)

    # ---- masks only for partial tiles (decided at trace time) ----
    valid = None
    if need_row_mask:
        row0 = (p_id * n_rt_pp + rt_id) * tile_r
        rid = row0 + lax.broadcasted_iota(jnp.int32, (tile_r, tile_hw), 0)
        valid = rid < rows
    if need_col_mask:
        cid = ht_id * tile_hw + lax.broadcasted_iota(jnp.int32, (tile_r, tile_hw), 1)
        cmask = cid < hw
        valid = cmask if valid is None else (valid & cmask)
    if valid is not None:
        bce = jnp.where(valid, bce, 0.0)
        prob = jnp.where(valid, prob, 0.0)
        t = jnp.where(valid, t, 0.0)

    # ---- per-row (TILE_R, 1) partial reductions across the hw axis ----
    bcer_ref[...] += jnp.sum(bce, axis=1, keepdims=True)
    inter_ref[...] += jnp.sum(prob * t, axis=1, keepdims=True)
    psum_ref[...] += jnp.sum(prob, axis=1, keepdims=True)
    tsum_ref[...] += jnp.sum(t, axis=1, keepdims=True)

    # ---- finalize this row tile at the last hw tile ----
    @pl.when(ht_id == n_ht - 1)
    def _():
        dice_rows = 1.0 - (2.0 * inter_ref[...] + smooth) / (
            psum_ref[...] + tsum_ref[...] + smooth)   # fully-masked rows give 0
        bce_part = jnp.sum(bcer_ref[...], keepdims=True)    # (1, 1)
        dice_part = jnp.sum(dice_rows, keepdims=True)       # (1, 1)
        rowi = lax.broadcasted_iota(jnp.int32, (8, 128), 0)
        sums_ref[...] += (jnp.where(rowi == 0, bce_part, 0.0)
                          + jnp.where(rowi == 1, dice_part, 0.0))

    # ---- write this partition's partial sums once, at its last grid step ----
    @pl.when((rt_id == n_rt_pp - 1) & (ht_id == n_ht - 1))
    def _():
        out_ref[0] = sums_ref[...]


def dice_bce_loss(x, target, alpha=0.5, smooth=1.0):
    """Forward pass of DiceBCELoss. x, target: NCHW arrays of equal shape."""
    B, C, H, W = x.shape
    rows, hw = B * C, H * W

    # Free reshapes only -- no pad, no dtype cast in the wrapper.
    xf = x.reshape(rows, hw)
    tf = target.reshape(rows, hw)

    tile_r, tile_hw = _choose_tiles(rows, hw)
    n_ht = pl.cdiv(hw, tile_hw)
    n_rt_total = pl.cdiv(rows, tile_r)
    n_parts = 2                      # v7x: one partition per TensorCore; harmless on v5e/v6e
    n_rt_pp = pl.cdiv(n_rt_total, n_parts)

    need_row_mask = (n_parts * n_rt_pp * tile_r != rows)
    need_col_mask = (n_ht * tile_hw != hw)

    kernel = functools.partial(
        _dice_bce_kernel,
        rows=rows, hw=hw, tile_r=tile_r, tile_hw=tile_hw,
        n_rt_pp=n_rt_pp, n_ht=n_ht, smooth=float(smooth),
        need_row_mask=need_row_mask, need_col_mask=need_col_mask,
    )

    def in_map(p, rt, ht):
        # Clamp row-block index (a partition may own a trailing OOB tile; it is
        # fully masked inside the kernel so any data it reads is ignored).
        return (jnp.minimum(p * n_rt_pp + rt, n_rt_total - 1), ht)

    parts = pl.pallas_call(
        kernel,
        out_shape=jax.ShapeDtypeStruct((n_parts, 8, 128), jnp.float32),
        grid_spec=pltpu.PrefetchScalarGridSpec(
            num_scalar_prefetch=0,
            grid=(n_parts, n_rt_pp, n_ht),
            in_specs=[
                pl.BlockSpec((tile_r, tile_hw), in_map),
                pl.BlockSpec((tile_r, tile_hw), in_map),
            ],
            out_specs=pl.BlockSpec((1, 8, 128), lambda p, rt, ht: (p, 0, 0)),
            scratch_shapes=[
                pltpu.VMEM((tile_r, 1), jnp.float32),   # intersection
                pltpu.VMEM((tile_r, 1), jnp.float32),   # prob sum
                pltpu.VMEM((tile_r, 1), jnp.float32),   # target sum
                pltpu.VMEM((tile_r, 1), jnp.float32),   # bce row sum
                pltpu.VMEM((8, 128), jnp.float32),      # partition partial sums
            ],
        ),
        compiler_params=pltpu.CompilerParams(
            dimension_semantics=("parallel", "arbitrary", "arbitrary")),
    )(xf, tf)

    # Tiny scalar combine in the wrapper (per the review: per-core partials).
    bce_sum = parts[:, 0, 0].sum()
    dice_sum = parts[:, 1, 0].sum()
    bce_loss = bce_sum / jnp.float32(rows * hw)
    dice_loss = dice_sum / jnp.float32(rows)
    loss = alpha * bce_loss + (1.0 - alpha) * dice_loss
    return loss, bce_loss, dice_loss


def _reference(x, t, alpha=0.5, smooth=1.0):
    """Plain-JAX reference mirroring the PyTorch module."""
    x = x.astype(jnp.float32)
    t = t.astype(jnp.float32)
    bce = jnp.mean(jnp.maximum(x, 0.0) - x * t + jnp.log1p(jnp.exp(-jnp.abs(x))))
    p = jax.nn.sigmoid(x)
    inter = jnp.sum(p * t, axis=(2, 3))
    denom = jnp.sum(p, axis=(2, 3)) + jnp.sum(t, axis=(2, 3))
    dice = jnp.mean(1.0 - (2.0 * inter + smooth) / (denom + smooth))
    return alpha * bce + (1 - alpha) * dice, bce, dice


if __name__ == "__main__":
    key = jax.random.PRNGKey(0)
    k1, k2 = jax.random.split(key)

    B, C, H, W = 2, 4, 16, 16
    logits = jax.random.normal(k1, (B, C, H, W), dtype=jnp.float32)
    target = jax.random.bernoulli(k2, 0.5, (B, C, H, W)).astype(jnp.float32)

    loss, bce_loss, dice_loss = dice_bce_loss(logits, target, alpha=0.5, smooth=1.0)
    jax.block_until_ready((loss, bce_loss, dice_loss))

    ref_loss, ref_bce, ref_dice = _reference(logits, target, alpha=0.5, smooth=1.0)
    # Tolerance is a bit looser than f32 epsilon because the sigmoid uses the
    # EUP approximate reciprocal (+1 Newton step) per the performance review.
    assert jnp.allclose(loss, ref_loss, atol=2e-4, rtol=2e-4)
    assert jnp.allclose(bce_loss, ref_bce, atol=2e-4, rtol=2e-4)
    assert jnp.allclose(dice_loss, ref_dice, atol=2e-4, rtol=2e-4)

    print("KERNEL_OK")
</pallas_src>

<mosaic_0001>
module attributes {stable_mosaic.version = 11 : i64} {
  func.func @_dice_bce_kernel(%arg0: i32, %arg1: i32, %arg2: i32, %arg3: memref<8x256xf32, #tpu.memory_space<vmem>>, %arg4: memref<8x256xf32, #tpu.memory_space<vmem>>, %arg5: memref<1x8x128xf32, #tpu.memory_space<vmem>>, %arg6: memref<8x1xf32, #tpu.memory_space<vmem>>, %arg7: memref<8x1xf32, #tpu.memory_space<vmem>>, %arg8: memref<8x1xf32, #tpu.memory_space<vmem>>, %arg9: memref<8x1xf32, #tpu.memory_space<vmem>>, %arg10: memref<8x128xf32, #tpu.memory_space<vmem>>) attributes {dimension_semantics = [#tpu.dimension_semantics<parallel>, #tpu.dimension_semantics<arbitrary>, #tpu.dimension_semantics<arbitrary>], iteration_bounds = array<i64: 2, 1, 1>, scalar_prefetch = 0 : i64, scratch_operands = 5 : i64, tpu.core_type = #tpu.core_type<tc>, window_params = [{transform_indices = @transform_0, window_bounds = array<i64: 8, 256>}, {transform_indices = @transform_1, window_bounds = array<i64: 8, 256>}, {transform_indices = @transform_2, window_bounds = array<i64: 1, 8, 128>}]} {
    %c0_i32 = arith.constant 0 : i32
    %0 = arith.cmpi eq, %arg1, %c0_i32 : i32
    %c0_i32_0 = arith.constant 0 : i32
    %1 = arith.cmpi eq, %arg2, %c0_i32_0 : i32
    %2 = arith.andi %0, %1 : i1
    %3 = arith.extui %2 : i1 to i32
    %c0_i32_1 = arith.constant 0 : i32
    %4 = arith.cmpi ne, %3, %c0_i32_1 : i32
    scf.if %4 {
      %cst_40 = arith.constant 0.000000e+00 : f32
      %74 = vector.broadcast %cst_40 : f32 to vector<8x128xf32>
      %c0_41 = arith.constant 0 : index
      %c0_42 = arith.constant 0 : index
      %75 = vector.load %arg10[%c0_41, %c0_42] : memref<8x128xf32, #tpu.memory_space<vmem>>, vector<8x128xf32>
      tpu.vector_store %arg10[%c0_41, %c0_42], %74 {strides = array<i32>} : memref<8x128xf32, #tpu.memory_space<vmem>>, vector<8x128xf32>,
    } else {
    }
    %c0_i32_2 = arith.constant 0 : i32
    %5 = arith.cmpi eq, %arg2, %c0_i32_2 : i32
    %6 = arith.extui %5 : i1 to i32
    %c0_i32_3 = arith.constant 0 : i32
    %7 = arith.cmpi ne, %6, %c0_i32_3 : i32
    scf.if %7 {
      %cst_40 = arith.constant 0.000000e+00 : f32
      %74 = vector.broadcast %cst_40 : f32 to vector<8x1xf32>
      %c0_41 = arith.constant 0 : index
      %c0_42 = arith.constant 0 : index
      %75 = vector.load %arg6[%c0_41, %c0_42] : memref<8x1xf32, #tpu.memory_space<vmem>>, vector<8x1xf32>
      tpu.vector_store %arg6[%c0_41, %c0_42], %74 {strides = array<i32>} : memref<8x1xf32, #tpu.memory_space<vmem>>, vector<8x1xf32>,
      %cst_43 = arith.constant 0.000000e+00 : f32
      %76 = vector.broadcast %cst_43 : f32 to vector<8x1xf32>
      %c0_44 = arith.constant 0 : index
      %c0_45 = arith.constant 0 : index
      %77 = vector.load %arg7[%c0_44, %c0_45] : memref<8x1xf32, #tpu.memory_space<vmem>>, vector<8x1xf32>
      tpu.vector_store %arg7[%c0_44, %c0_45], %76 {strides = array<i32>} : memref<8x1xf32, #tpu.memory_space<vmem>>, vector<8x1xf32>,
      %cst_46 = arith.constant 0.000000e+00 : f32
      %78 = vector.broadcast %cst_46 : f32 to vector<8x1xf32>
      %c0_47 = arith.constant 0 : index
      %c0_48 = arith.constant 0 : index
      %79 = vector.load %arg8[%c0_47, %c0_48] : memref<8x1xf32, #tpu.memory_space<vmem>>, vector<8x1xf32>
      tpu.vector_store %arg8[%c0_47, %c0_48], %78 {strides = array<i32>} : memref<8x1xf32, #tpu.memory_space<vmem>>, vector<8x1xf32>,
      %cst_49 = arith.constant 0.000000e+00 : f32
      %80 = vector.broadcast %cst_49 : f32 to vector<8x1xf32>
      %c0_50 = arith.constant 0 : index
      %c0_51 = arith.constant 0 : index
      %81 = vector.load %arg9[%c0_50, %c0_51] : memref<8x1xf32, #tpu.memory_space<vmem>>, vector<8x1xf32>
      tpu.vector_store %arg9[%c0_50, %c0_51], %80 {strides = array<i32>} : memref<8x1xf32, #tpu.memory_space<vmem>>, vector<8x1xf32>,
    } else {
    }
    %c0 = arith.constant 0 : index
    %c0_4 = arith.constant 0 : index
    %8 = vector.load %arg3[%c0, %c0_4] : memref<8x256xf32, #tpu.memory_space<vmem>>, vector<8x256xf32>
    %c0_5 = arith.constant 0 : index
    %c0_6 = arith.constant 0 : index
    %9 = vector.load %arg4[%c0_5, %c0_6] : memref<8x256xf32, #tpu.memory_space<vmem>>, vector<8x256xf32>
    %10 = math.absf %8 : vector<8x256xf32>
    %cst = arith.constant 0.000000e+00 : f32
    %11 = vector.broadcast %cst : f32 to vector<8x256xf32>
    %12 = arith.subf %11, %10 : vector<8x256xf32>
    %13 = math.exp %12 : vector<8x256xf32>
    %cst_7 = arith.constant 0.000000e+00 : f32
    %14 = vector.broadcast %cst_7 : f32 to vector<8x256xf32>
    %15 = arith.maximumf %8, %14 : vector<8x256xf32>
    %16 = arith.mulf %8, %9 : vector<8x256xf32>
    %17 = arith.subf %15, %16 : vector<8x256xf32>
    %18 = math.log1p %13 : vector<8x256xf32>
    %19 = arith.addf %17, %18 : vector<8x256xf32>
    %cst_8 = arith.constant 1.000000e+00 : f32
    %20 = vector.broadcast %cst_8 : f32 to vector<8x256xf32>
    %21 = arith.addf %20, %13 : vector<8x256xf32>
    %22 = tpu.reciprocal %21 {approx = true} : vector<8x256xf32> -> vector<8x256xf32>
    %23 = arith.mulf %21, %22 : vector<8x256xf32>
    %cst_9 = arith.constant 2.000000e+00 : f32
    %24 = vector.broadcast %cst_9 : f32 to vector<8x256xf32>
    %25 = arith.subf %24, %23 : vector<8x256xf32>
    %26 = arith.mulf %22, %25 : vector<8x256xf32>
    %cst_10 = arith.constant 0.000000e+00 : f32
    %27 = vector.broadcast %cst_10 : f32 to vector<8x256xf32>
    %28 = arith.cmpf oge, %8, %27 : vector<8x256xf32>
    %29 = arith.mulf %13, %26 : vector<8x256xf32>
    %30 = arith.select %28, %26, %29 : vector<8x256xi1>, vector<8x256xf32>
    %c1_i32 = arith.constant 1 : i32
    %31 = arith.muli %arg0, %c1_i32 : i32
    %32 = arith.addi %31, %arg1 : i32
    %c8_i32 = arith.constant 8 : i32
    %33 = arith.muli %32, %c8_i32 : i32
    %34 = tpu.iota {dimensions = array<i32: 0>} : vector<8x256xi32>
    %35 = vector.broadcast %33 : i32 to vector<8x256xi32>
    %36 = arith.addi %35, %34 : vector<8x256xi32>
    %c8_i32_11 = arith.constant 8 : i32
    %37 = vector.broadcast %c8_i32_11 : i32 to vector<8x256xi32>
    %38 = arith.cmpi slt, %36, %37 : vector<8x256xi32>
    %cst_12 = arith.constant 0.000000e+00 : f32
    %39 = vector.broadcast %cst_12 : f32 to vector<8x256xf32>
    %40 = arith.select %38, %19, %39 : vector<8x256xi1>, vector<8x256xf32>
    %cst_13 = arith.constant 0.000000e+00 : f32
    %41 = vector.broadcast %cst_13 : f32 to vector<8x256xf32>
    %42 = arith.select %38, %30, %41 : vector<8x256xi1>, vector<8x256xf32>
    %cst_14 = arith.constant 0.000000e+00 : f32
    %43 = vector.broadcast %cst_14 : f32 to vector<8x256xf32>
    %44 = arith.select %38, %9, %43 : vector<8x256xi1>, vector<8x256xf32>
    %c0_15 = arith.constant 0 : index
    %c0_16 = arith.constant 0 : index
    %45 = vector.load %arg9[%c0_15, %c0_16] : memref<8x1xf32, #tpu.memory_space<vmem>>, vector<8x1xf32>
    %cst_17 = arith.constant dense<0.000000e+00> : vector<8xf32>
    %46 = vector.multi_reduction <add>, %40, %cst_17 [1] : vector<8x256xf32> to vector<8xf32>
    %47 = vector.shape_cast %46 : vector<8xf32> to vector<8x1xf32>
    %48 = arith.addf %45, %47 : vector<8x1xf32>
    %c0_18 = arith.constant 0 : index
    %c0_19 = arith.constant 0 : index
    %49 = vector.load %arg9[%c0_18, %c0_19] : memref<8x1xf32, #tpu.memory_space<vmem>>, vector<8x1xf32>
    tpu.vector_store %arg9[%c0_18, %c0_19], %48 {strides = array<i32>} : memref<8x1xf32, #tpu.memory_space<vmem>>, vector<8x1xf32>,
    %c0_20 = arith.constant 0 : index
    %c0_21 = arith.constant 0 : index
    %50 = vector.load %arg6[%c0_20, %c0_21] : memref<8x1xf32, #tpu.memory_space<vmem>>, vector<8x1xf32>
    %51 = arith.mulf %42, %44 : vector<8x256xf32>
    %cst_22 = arith.constant dense<0.000000e+00> : vector<8xf32>
    %52 = vector.multi_reduction <add>, %51, %cst_22 [1] : vector<8x256xf32> to vector<8xf32>
    %53 = vector.shape_cast %52 : vector<8xf32> to vector<8x1xf32>
    %54 = arith.addf %50, %53 : vector<8x1xf32>
    %c0_23 = arith.constant 0 : index
    %c0_24 = arith.constant 0 : index
    %55 = vector.load %arg6[%c0_23, %c0_24] : memref<8x1xf32, #tpu.memory_space<vmem>>, vector<8x1xf32>
    tpu.vector_store %arg6[%c0_23, %c0_24], %54 {strides = array<i32>} : memref<8x1xf32, #tpu.memory_space<vmem>>, vector<8x1xf32>,
    %c0_25 = arith.constant 0 : index
    %c0_26 = arith.constant 0 : index
    %56 = vector.load %arg7[%c0_25, %c0_26] : memref<8x1xf32, #tpu.memory_space<vmem>>, vector<8x1xf32>
    %cst_27 = arith.constant dense<0.000000e+00> : vector<8xf32>
    %57 = vector.multi_reduction <add>, %42, %cst_27 [1] : vector<8x256xf32> to vector<8xf32>
    %58 = vector.shape_cast %57 : vector<8xf32> to vector<8x1xf32>
    %59 = arith.addf %56, %58 : vector<8x1xf32>
    %c0_28 = arith.constant 0 : index
    %c0_29 = arith.constant 0 : index
    %60 = vector.load %arg7[%c0_28, %c0_29] : memref<8x1xf32, #tpu.memory_space<vmem>>, vector<8x1xf32>
    tpu.vector_store %arg7[%c0_28, %c0_29], %59 {strides = array<i32>} : memref<8x1xf32, #tpu.memory_space<vmem>>, vector<8x1xf32>,
    %c0_30 = arith.constant 0 : index
    %c0_31 = arith.constant 0 : index
    %61 = vector.load %arg8[%c0_30, %c0_31] : memref<8x1xf32, #tpu.memory_space<vmem>>, vector<8x1xf32>
    %cst_32 = arith.constant dense<0.000000e+00> : vector<8xf32>
    %62 = vector.multi_reduction <add>, %44, %cst_32 [1] : vector<8x256xf32> to vector<8xf32>
    %63 = vector.shape_cast %62 : vector<8xf32> to vector<8x1xf32>
    %64 = arith.addf %61, %63 : vector<8x1xf32>
    %c0_33 = arith.constant 0 : index
    %c0_34 = arith.constant 0 : index
    %65 = vector.load %arg8[%c0_33, %c0_34] : memref<8x1xf32, #tpu.memory_space<vmem>>, vector<8x1xf32>
    tpu.vector_store %arg8[%c0_33, %c0_34], %64 {strides = array<i32>} : memref<8x1xf32, #tpu.memory_space<vmem>>, vector<8x1xf32>,
    %c0_i32_35 = arith.constant 0 : i32
    %66 = arith.cmpi eq, %arg2, %c0_i32_35 : i32
    %67 = arith.extui %66 : i1 to i32
    %c0_i32_36 = arith.constant 0 : i32
    %68 = arith.cmpi ne, %67, %c0_i32_36 : i32
    scf.if %68 {
      %c0_40 = arith.constant 0 : index
      %c0_41 = arith.constant 0 : index
      %74 = vector.load %arg6[%c0_40, %c0_41] : memref<8x1xf32, #tpu.memory_space<vmem>>, vector<8x1xf32>
      %cst_42 = arith.constant 2.000000e+00 : f32
      %75 = vector.broadcast %cst_42 : f32 to vector<8x1xf32>
      %76 = arith.mulf %75, %74 : vector<8x1xf32>
      %cst_43 = arith.constant 1.000000e+00 : f32
      %77 = vector.broadcast %cst_43 : f32 to vector<8x1xf32>
      %78 = arith.addf %76, %77 : vector<8x1xf32>
      %c0_44 = arith.constant 0 : index
      %c0_45 = arith.constant 0 : index
      %79 = vector.load %arg7[%c0_44, %c0_45] : memref<8x1xf32, #tpu.memory_space<vmem>>, vector<8x1xf32>
      %c0_46 = arith.constant 0 : index
      %c0_47 = arith.constant 0 : index
      %80 = vector.load %arg8[%c0_46, %c0_47] : memref<8x1xf32, #tpu.memory_space<vmem>>, vector<8x1xf32>
      %81 = arith.addf %79, %80 : vector<8x1xf32>
      %cst_48 = arith.constant 1.000000e+00 : f32
      %82 = vector.broadcast %cst_48 : f32 to vector<8x1xf32>
      %83 = arith.addf %81, %82 : vector<8x1xf32>
      %84 = arith.divf %78, %83 : vector<8x1xf32>
      %cst_49 = arith.constant 1.000000e+00 : f32
      %85 = vector.broadcast %cst_49 : f32 to vector<8x1xf32>
      %86 = arith.subf %85, %84 : vector<8x1xf32>
      %c0_50 = arith.constant 0 : index
      %c0_51 = arith.constant 0 : index
      %87 = vector.load %arg9[%c0_50, %c0_51] : memref<8x1xf32, #tpu.memory_space<vmem>>, vector<8x1xf32>
      %88 = vector.shape_cast %87 : vector<8x1xf32> to vector<1x8x1xf32>
      %cst_52 = arith.constant dense<0.000000e+00> : vector<1xf32>
      %89 = vector.multi_reduction <add>, %88, %cst_52 [1, 2] : vector<1x8x1xf32> to vector<1xf32>
      %90 = vector.shape_cast %89 : vector<1xf32> to vector<1x1x1xf32>
      %91 = vector.extract %90[0, 0, 0] : f32 from vector<1x1x1xf32>
      %92 = vector.broadcast %91 : f32 to vector<1x1xf32>
      %93 = vector.shape_cast %86 : vector<8x1xf32> to vector<1x8x1xf32>
      %cst_53 = arith.constant dense<0.000000e+00> : vector<1xf32>
      %94 = vector.multi_reduction <add>, %93, %cst_53 [1, 2] : vector<1x8x1xf32> to vector<1xf32>
      %95 = vector.shape_cast %94 : vector<1xf32> to vector<1x1x1xf32>
      %96 = vector.extract %95[0, 0, 0] : f32 from vector<1x1x1xf32>
      %97 = vector.broadcast %96 : f32 to vector<1x1xf32>
      %98 = tpu.iota {dimensions = array<i32: 0>} : vector<8x128xi32>
      %c0_54 = arith.constant 0 : index
      %c0_55 = arith.constant 0 : index
      %99 = vector.load %arg10[%c0_54, %c0_55] : memref<8x128xf32, #tpu.memory_space<vmem>>, vector<8x128xf32>
      %c0_i32_56 = arith.constant 0 : i32
      %100 = vector.broadcast %c0_i32_56 : i32 to vector<8x128xi32>
      %101 = arith.cmpi eq, %98, %100 : vector<8x128xi32>
      %cst_57 = arith.constant 0.000000e+00 : f32
      %102 = vector.shape_cast %92 : vector<1x1xf32> to vector<1x1xf32>
      %103 = vector.broadcast %102 : vector<1x1xf32> to vector<8x128xf32>
      %104 = vector.broadcast %cst_57 : f32 to vector<8x128xf32>
      %105 = arith.select %101, %103, %104 : vector<8x128xi1>, vector<8x128xf32>
      %c1_i32_58 = arith.constant 1 : i32
      %106 = vector.broadcast %c1_i32_58 : i32 to vector<8x128xi32>
      %107 = arith.cmpi eq, %98, %106 : vector<8x128xi32>
      %cst_59 = arith.constant 0.000000e+00 : f32
      %108 = vector.shape_cast %97 : vector<1x1xf32> to vector<1x1xf32>
      %109 = vector.broadcast %108 : vector<1x1xf32> to vector<8x128xf32>
      %110 = vector.broadcast %cst_59 : f32 to vector<8x128xf32>
      %111 = arith.select %107, %109, %110 : vector<8x128xi1>, vector<8x128xf32>
      %112 = arith.addf %105, %111 : vector<8x128xf32>
      %113 = arith.addf %99, %112 : vector<8x128xf32>
      %c0_60 = arith.constant 0 : index
      %c0_61 = arith.constant 0 : index
      %114 = vector.load %arg10[%c0_60, %c0_61] : memref<8x128xf32, #tpu.memory_space<vmem>>, vector<8x128xf32>
      tpu.vector_store %arg10[%c0_60, %c0_61], %113 {strides = array<i32>} : memref<8x128xf32, #tpu.memory_space<vmem>>, vector<8x128xf32>,
    } else {
    }
    %c0_i32_37 = arith.constant 0 : i32
    %69 = arith.cmpi eq, %arg1, %c0_i32_37 : i32
    %c0_i32_38 = arith.constant 0 : i32
    %70 = arith.cmpi eq, %arg2, %c0_i32_38 : i32
    %71 = arith.andi %69, %70 : i1
    %72 = arith.extui %71 : i1 to i32
    %c0_i32_39 = arith.constant 0 : i32
    %73 = arith.cmpi ne, %72, %c0_i32_39 : i32
    scf.if %73 {
      %c0_40 = arith.constant 0 : index
      %c0_41 = arith.constant 0 : index
      %74 = vector.load %arg10[%c0_40, %c0_41] : memref<8x128xf32, #tpu.memory_space<vmem>>, vector<8x128xf32>
      %c0_42 = arith.constant 0 : index
      %c0_43 = arith.constant 0 : index
      %c0_44 = arith.constant 0 : index
      %75 = vector.load %arg5[%c0_42, %c0_43, %c0_44] : memref<1x8x128xf32, #tpu.memory_space<vmem>>, vector<1x8x128xf32>
      %76 = vector.shape_cast %75 : vector<1x8x128xf32> to vector<8x128xf32>
      %77 = vector.shape_cast %74 : vector<8x128xf32> to vector<1x8x128xf32>
      tpu.vector_store %arg5[%c0_42, %c0_43, %c0_44], %77 {strides = array<i32>} : memref<1x8x128xf32, #tpu.memory_space<vmem>>, vector<1x8x128xf32>,
    } else {
    }
    return
  }
  func.func @transform_0(%arg0: i32, %arg1: i32, %arg2: i32) -> (i32, i32) {
    %c1_i32 = arith.constant 1 : i32
    %0 = arith.muli %arg0, %c1_i32 : i32
    %1 = arith.addi %0, %arg1 : i32
    %c0_i32 = arith.constant 0 : i32
    %2 = arith.minsi %1, %c0_i32 : i32
    %c0_i32_0 = arith.constant 0 : i32
    return %2, %arg2 : i32, i32
  }
  func.func @transform_1(%arg0: i32, %arg1: i32, %arg2: i32) -> (i32, i32) {
    %c1_i32 = arith.constant 1 : i32
    %0 = arith.muli %arg0, %c1_i32 : i32
    %1 = arith.addi %0, %arg1 : i32
    %c0_i32 = arith.constant 0 : i32
    %2 = arith.minsi %1, %c0_i32 : i32
    %c0_i32_0 = arith.constant 0 : i32
    return %2, %arg2 : i32, i32
  }
  func.func @transform_2(%arg0: i32, %arg1: i32, %arg2: i32) -> (i32, i32, i32) {
    %c0_i32 = arith.constant 0 : i32
    %c0_i32_0 = arith.constant 0 : i32
    %c0_i32_1 = arith.constant 0 : i32
    return %arg0, %c0_i32, %c0_i32_0 : i32, i32, i32
  }
}

</mosaic_0001>

<llo_original>
// kernel: tpu_custom_call.1
$region0: #{tpu_custom_call.1}
  #allocation0 [shape = 'u32[]', space=smem, size = 0x4, offset = 0x4, fixed_abs, tag = 'smem constant byte address 0x4 - core index']
  #allocation1 [shape = 'u32[144,128]{1,0:T(1,128)}', space=vmem, size = 0x12000, scoped, tag = 'internal scratch']
  #allocation2 [shape = 'f32[8,1]{1,0:T(8,128)}', space=vmem, size = 0x1000, scoped, tag = 'scratch operand']
  #allocation3 [shape = 'f32[8,1]{1,0:T(8,128)}', space=vmem, size = 0x1000, scoped, tag = 'scratch operand']
  #allocation4 [shape = 'f32[8,1]{1,0:T(8,128)}', space=vmem, size = 0x1000, scoped, tag = 'scratch operand']
  #allocation5 [shape = 'f32[8,1]{1,0:T(8,128)}', space=vmem, size = 0x1000, scoped, tag = 'scratch operand']
  #allocation6 [shape = 'f32[8,128]{1,0:T(8,128)}', space=vmem, size = 0x1000, scoped, tag = 'scratch operand']
  %s0 = inlined_call_operand.hbm [shape: f32[8,256], index: 0, kind: input, shape index: {}]
  %s1 = inlined_call_operand.hbm [shape: f32[8,256], index: 1, kind: input, shape index: {}]
  %s2 = inlined_call_operand.hbm [shape: f32[2,8,128], index: 2, kind: output, shape index: {}]
  %s3 = sld [smem:[#allocation0]]
  $region65: #{tpu_custom_call.1} parent=0
    _
  %s5 = ssub.s32 1, %s3
  %s6 = scalar_select 0, %s5, %s3
  $region1: #{tpu_custom_call.1} parent=0
    #allocation7 [shape = 'u8[16384]{0}', space=vmem, size = 0x4000, scoped, tag = 'input window, operand 0']
    #allocation8 [shape = 's32[2]{0}', space=sflag, size = 0x8, scoped, tag = 'scoped memory for tpu_custom_call.1']
    #allocation9 [shape = 's32[2]{0}', space=sflag, size = 0x8, scoped, tag = 'scoped memory for tpu_custom_call.1']
    #allocation10 [shape = 'u8[16384]{0}', space=vmem, size = 0x4000, scoped, tag = 'input window, operand 1']
    #allocation11 [shape = 's32[2]{0}', space=sflag, size = 0x8, scoped, tag = 'scoped memory for tpu_custom_call.1']
    #allocation12 [shape = 'u8[8192]{0}', space=vmem, size = 0x2000, scoped, tag = 'output window, operand 0']
    %7 = vsyncpa [#allocation8], 0
    %s8 = scalar_lea.sflag [#allocation8], 1
    %9 = vsyncpa %s8, 0
    %10 = vsyncpa [#allocation11], 0
    %s11 = scalar_lea.sflag [#allocation11], 1
    %12 = vsyncpa %s11, 0
    %13 = vsyncpa [#allocation9], 0
    %s14 = scalar_lea.sflag [#allocation9], 1
    %15 = vsyncpa %s14, 0
    loop: start=0, step=1, limit=4
    $region2: #{tpu_custom_call.1} parent=1 // loop_pre_header
      _
    $region3: #{tpu_custom_call.1} parent=1 // loop_header
      %s17 = sphi 0, %s21
      %p18 = scmp.ge.s32.totalorder %s17, 4
      %s24 = sphi 0, %s43
      %s25 = sphi 0, %s39
      %s26 = sphi 0, %s35
      %s27 = sphi 0, %s24
      %s28 = sphi 0, %s25
      %s29 = sphi 0, %s26
      %s30 = sphi 0, %s27
      %s31 = sphi 0, %s28
      %s32 = sphi 0, %s29
      %s54 = sphi 0, %s56
      %s57 = sphi 0, %s54
      %s58 = sphi 0, %s57
      %s74 = sphi 0, %s58
      %s88 = sphi 0, %s90
      %s91 = sphi 0, %s88
      %s92 = sphi 0, %s91
      %s108 = sphi 0, %s92
      %s114 = sphi 0, %s116
      %s117 = sphi 0, %s114
      %s118 = sphi 0, %s117
      %s134 = sphi 0, %s118
    $region4: #{tpu_custom_call.1} parent=1 // loop_header_branch
      %20 = sbr.rel (%p18) target = $region8
    $region5: #{tpu_custom_call.1} parent=1 // loop_body
      %s22 = ssub.s32 %s17, 1
      %s23 = ssub.s32 %s17, 2
      %s33 = sadd.s32 1, %s26
      %p34 = scmp.ge.s32.totalorder %s33, 1
      %s35 = scalar_select %p34, 0, %s33
      %s36 = sadd.s32 1, %s25
      %s37 = scalar_select %p34, %s36, %s25
      %p38 = scmp.ge.s32.totalorder %s37, 1
      %s39 = scalar_select %p38, 0, %s37
      %s40 = sadd.s32 1, %s24
      %s41 = scalar_select %p38, %s40, %s24
      %p42 = scmp.ge.s32.totalorder %s41, 2
      %s43 = scalar_select %p42, 0, %s41
      %s44 = sadd.s32 %s24, %s25
      %p45 = scmp.lt.s32.totalorder %s44, 0
      %s46 = scalar_select %p45, %s44, 0
      %s47 = sadd.s32 %s43, %s39
      %p48 = scmp.lt.s32.totalorder %s47, 0
      %s49 = scalar_select %p48, %s47, 0
      %s50 = ssub.s32 %s46, %s49
      %s51 = ssub.s32 %s26, %s35
      %s52 = sor.u32 %s50, %s51
      %p53 = scmp.eq.s32.totalorder %s52, 0
      %s55 = sadd.s32 %s54, 1
      %s56 = scalar_select %p53, %s54, %s55
      %p59 = pneg %p53
      %p60 = scmp.eq.s32.totalorder %s17, 1
      %p61 = por %p59, %p60
      %p62 = scmp.ne.s32.totalorder %s54, %s57
      %p63 = scmp.eq.s32.totalorder %s17, 0
      %p64 = por %p62, %p63
      %p65 = scmp.ne.s32.totalorder %s54, %s57
      %p66 = scmp.eq.s32.totalorder %s22, 1
      %p67 = por %p65, %p66
      %p68 = scmp.ne.s32.totalorder %s57, %s58
      %p69 = scmp.eq.s32.totalorder %s22, 0
      %p70 = por %p68, %p69
      %p71 = scmp.ne.s32.totalorder %s57, %s58
      %p72 = scmp.eq.s32.totalorder %s23, 1
      %p73 = por %p71, %p72
      %p75 = scmp.ne.s32.totalorder %s58, %s74
      %p76 = scmp.eq.s32.totalorder %s23, 0
      %p77 = por %p75, %p76
      %s78 = sadd.s32 %s24, %s25
      %p79 = scmp.lt.s32.totalorder %s78, 0
      %s80 = scalar_select %p79, %s78, 0
      %s81 = sadd.s32 %s43, %s39
      %p82 = scmp.lt.s32.totalorder %s81, 0
      %s83 = scalar_select %p82, %s81, 0
      %s84 = ssub.s32 %s80, %s83
      %s85 = ssub.s32 %s26, %s35
      %s86 = sor.u32 %s84, %s85
      %p87 = scmp.eq.s32.totalorder %s86, 0
      %s89 = sadd.s32 %s88, 1
      %s90 = scalar_select %p87, %s88, %s89
      %p93 = pneg %p87
      %p94 = scmp.eq.s32.totalorder %s17, 1
      %p95 = por %p93, %p94
      %p96 = scmp.ne.s32.totalorder %s88, %s91
      %p97 = scmp.eq.s32.totalorder %s17, 0
      %p98 = por %p96, %p97
      %p99 = scmp.ne.s32.totalorder %s88, %s91
      %p100 = scmp.eq.s32.totalorder %s22, 1
      %p101 = por %p99, %p100
      %p102 = scmp.ne.s32.totalorder %s91, %s92
      %p103 = scmp.eq.s32.totalorder %s22, 0
      %p104 = por %p102, %p103
      %p105 = scmp.ne.s32.totalorder %s91, %s92
      %p106 = scmp.eq.s32.totalorder %s23, 1
      %p107 = por %p105, %p106
      %p109 = scmp.ne.s32.totalorder %s92, %s108
      %p110 = scmp.eq.s32.totalorder %s23, 0
      %p111 = por %p109, %p110
      %s112 = ssub.s32 %s24, %s43
      %p113 = scmp.eq.s32.totalorder %s112, 0
      %s115 = sadd.s32 %s114, 1
      %s116 = scalar_select %p113, %s114, %s115
      %p119 = pneg %p113
      %p120 = scmp.eq.s32.totalorder %s17, 1
      %p121 = por %p119, %p120
      %p122 = scmp.ne.s32.totalorder %s114, %s117
      %p123 = scmp.eq.s32.totalorder %s17, 0
      %p124 = por %p122, %p123
      %p125 = scmp.ne.s32.totalorder %s114, %s117
      %p126 = scmp.eq.s32.totalorder %s22, 1
      %p127 = por %p125, %p126
      %p128 = scmp.ne.s32.totalorder %s117, %s118
      %p129 = scmp.eq.s32.totalorder %s22, 0
      %p130 = por %p128, %p129
      %p131 = scmp.ne.s32.totalorder %s117, %s118
      %p132 = scmp.eq.s32.totalorder %s23, 1
      %p133 = por %p131, %p132
      %p135 = scmp.ne.s32.totalorder %s118, %s134
      %p136 = scmp.eq.s32.totalorder %s23, 0
      %p137 = por %p135, %p136
      %p138 = scmp.le.s32.totalorder 1, %s17
      %p139 = scmp.lt.s32.totalorder %s17, 3
      %p140 = pnand %p138, %p139
      %p141 = pneg %p140
      // Predicated region
      $region9: #{tpu_custom_call.1} parent=5 // pred_check
        _
      $region10: #{tpu_custom_call.1} parent=5 // pred_check_branch
        %143 = sbr.rel (%p140) target = $region12
      $region11: #{tpu_custom_call.1} parent=5 // pred_region
        %s144 = ssub.s32 %s17, 1
      $region12: #{tpu_custom_call.1} parent=5 // pred_fallthru
        _
      %p145 = scmp.lt.s32.totalorder %s17, 2
      // Predicated region
      $region13: #{tpu_custom_call.1} parent=5 // pred_check
        %p146 = pneg %p145
      $region14: #{tpu_custom_call.1} parent=5 // pred_check_branch
        %148 = sbr.rel (%p146) target = $region16
      $region15: #{tpu_custom_call.1} parent=5 // pred_region
        // Predicated region
        $region17: #{tpu_custom_call.1} parent=15 // pred_check
          %p149 = pneg %p64
        $region18: #{tpu_custom_call.1} parent=15 // pred_check_branch
          %151 = sbr.rel (%p149) target = $region20
        $region19: #{tpu_custom_call.1} parent=15 // pred_region
          %s152 = sand.u32 %s54, 1
          %s153 = scalar_lea.sflag [#allocation8], %s152
          %s154 = sand.u32 %s54, 1
          %s155 = smul.addr %s154, 16
          %s156 = scalar_lea.vmem [#allocation7], %s155
          %s157 = sadd.s32 %s24, %s25
          %p158 = scmp.lt.s32.totalorder %s157, 0
          %s159 = scalar_select %p158, %s157, 0
          %s160 = smul.u32 2, %s26
          %s162 = ssub.s32 256, 256
          %163 = vsyncadd %s153, %s162
          %s164 = smul.addr %s159, 2
          %s165 = sadd.s32 %s160, %s164
          %s166 = smul.addr %s165, 128
          %s167 = scalar_lea.hbm %s0, %s166
          %s169 = sshll.u32 %s156, 4
          %s170 = int_to_ptr.vmem [resolvable:$true] %s169
          %172 = dma.hbm_to_vmem [thread:$0]  %s167, 256, %s170, %s153
        $region20: #{tpu_custom_call.1} parent=15 // pred_fallthru
          _
        // Predicated region
        $region21: #{tpu_custom_call.1} parent=15 // pred_check
          %p173 = pneg %p98
        $region22: #{tpu_custom_call.1} parent=15 // pred_check_branch
          %175 = sbr.rel (%p173) target = $region24
        $region23: #{tpu_custom_call.1} parent=15 // pred_region
          %s176 = sand.u32 %s88, 1
          %s177 = scalar_lea.sflag [#allocation11], %s176
          %s178 = sand.u32 %s88, 1
          %s179 = smul.addr %s178, 16
          %s180 = scalar_lea.vmem [#allocation10], %s179
          %s181 = sadd.s32 %s24, %s25
          %p182 = scmp.lt.s32.totalorder %s181, 0
          %s183 = scalar_select %p182, %s181, 0
          %s184 = smul.u32 2, %s26
          %s186 = ssub.s32 256, 256
          %187 = vsyncadd %s177, %s186
          %s188 = smul.addr %s183, 2
          %s189 = sadd.s32 %s184, %s188
          %s190 = smul.addr %s189, 128
          %s191 = scalar_lea.hbm %s1, %s190
          %s193 = sshll.u32 %s180, 4
          %s194 = int_to_ptr.vmem [resolvable:$true] %s193
          %196 = dma.hbm_to_vmem [thread:$0]  %s191, 256, %s194, %s177
        $region24: #{tpu_custom_call.1} parent=15 // pred_fallthru
          _
      $region16: #{tpu_custom_call.1} parent=5 // pred_fallthru
        _
      %p197 = scmp.le.s32.totalorder 1, %s17
      %p198 = scmp.lt.s32.totalorder %s17, 3
      %p199 = pnand %p197, %p198
      %p200 = pneg %p199
      // Predicated region
      $region25: #{tpu_custom_call.1} parent=5 // pred_check
        _
      $region26: #{tpu_custom_call.1} parent=5 // pred_check_branch
        %202 = sbr.rel (%p199) target = $region28
      $region27: #{tpu_custom_call.1} parent=5 // pred_region
        %s203 = ssub.s32 %s17, 1
        %s204 = sand.u32 %s57, 1
        %s205 = scalar_lea.sflag [#allocation8], %s204
        %s206 = sand.u32 %s57, 1
        %s207 = smul.addr %s206, 16
        %s208 = scalar_lea.vmem [#allocation7], %s207
        // Predicated region
        $region29: #{tpu_custom_call.1} parent=27 // pred_check
          %p209 = pneg %p70
        $region30: #{tpu_custom_call.1} parent=27 // pred_check_branch
          %211 = sbr.rel (%p209) target = $region32
        $region31: #{tpu_custom_call.1} parent=27 // pred_region
          %212 = dma.done %s205, 256
        $region32: #{tpu_custom_call.1} parent=27 // pred_fallthru
          _
        %s213 = sand.u32 %s91, 1
        %s214 = scalar_lea.sflag [#allocation11], %s213
        %s215 = sand.u32 %s91, 1
        %s216 = smul.addr %s215, 16
        %s217 = scalar_lea.vmem [#allocation10], %s216
        // Predicated region
        $region33: #{tpu_custom_call.1} parent=27 // pred_check
          %p218 = pneg %p104
        $region34: #{tpu_custom_call.1} parent=27 // pred_check_branch
          %220 = sbr.rel (%p218) target = $region36
        $region35: #{tpu_custom_call.1} parent=27 // pred_region
          %221 = dma.done %s214, 256
        $region36: #{tpu_custom_call.1} parent=27 // pred_fallthru
          _
        %s222 = sand.u32 %s57, 1
        %s223 = scalar_lea.sflag [#allocation8], %s222
        %s224 = sand.u32 %s57, 1
        %s225 = smul.addr %s224, 16
        %s226 = scalar_lea.vmem [#allocation7], %s225
        %p227 = pneg %p70
        %p228 = pneg %p67
        %s229 = sand.u32 %s91, 1
        %s230 = scalar_lea.sflag [#allocation11], %s229
        %s231 = sand.u32 %s91, 1
        %s232 = smul.addr %s231, 16
        %s233 = scalar_lea.vmem [#allocation10], %s232
        %p234 = pneg %p104
        %p235 = pneg %p101
        %p236 = pneg %p130
        %p237 = pneg %p127
        %s238 = sand.u32 %s117, 1
        %s239 = scalar_lea.sflag [#allocation9], %s238
        %s240 = sand.u32 %s117, 1
        %s241 = smul.addr %s240, 8
        %s242 = scalar_lea.vmem [#allocation12], %s241
        %s243 = sadd.s32 %s27, %s28
        %p244 = scmp.lt.s32.totalorder %s243, 0
        %s245 = scalar_select %p244, %s243, 0
        %s246 = smul.u32 2, %s29
        %s247 = sadd.s32 %s27, %s28
        %p248 = scmp.lt.s32.totalorder %s247, 0
        %s249 = scalar_select %p248, %s247, 0
        %s250 = smul.u32 2, %s29
        %p251 = scmp.eq.s32.totalorder %s28, 0
        %p252 = scmp.eq.s32.totalorder %s29, 0
        %p253 = pnand %p251, %p252
        %p254 = pneg %p253
        // Predicated region
        $region37: #{tpu_custom_call.1} parent=27 // pred_check
          _
        $region38: #{tpu_custom_call.1} parent=27 // pred_check_branch
          %256 = sbr.rel (%p253) target = $region40
        $region39: #{tpu_custom_call.1} parent=27 // pred_region
          %257 = vst [vmem:[#allocation6] sm:$0xff] 0.0
        $region40: #{tpu_custom_call.1} parent=27 // pred_fallthru
          _
        // Predicated region
        $region41: #{tpu_custom_call.1} parent=27 // pred_check
          %p258 = pneg %p252
        $region42: #{tpu_custom_call.1} parent=27 // pred_check_branch
          %260 = sbr.rel (%p258) target = $region44
        $region43: #{tpu_custom_call.1} parent=27 // pred_region
          %vm261 = vcmask 7168
          %262 = vst.msk [vmem:[#allocation2] sm:$0xff] %vm261, 0.0
          %263 = vst.msk [vmem:[#allocation3] sm:$0xff] %vm261, 0.0
          %264 = vst.msk [vmem:[#allocation4] sm:$0xff] %vm261, 0.0
          %265 = vst.msk [vmem:[#allocation5] sm:$0xff] %vm261, 0.0
        $region44: #{tpu_custom_call.1} parent=27 // pred_fallthru
          _
        %v266 = vld [vmem:[%s208] sm:$0xff]
        %v267 = vld [vmem:[%s208 + $0x8] sm:$0xff]
        %v268 = vld [vmem:[%s217] sm:$0xff]
        %v269 = vld [vmem:[%s217 + $0x8] sm:$0xff]
        %v270 = vand.u32 2147483647, %v266
        %v271 = vand.u32 2147483647, %v267
        %v272 = vsub.f32 0.0, %v270
        %v273 = vsub.f32 0.0, %v271
        %v274 = vmul.f32 %v272, 1.442695
        %v275 = vpow.pop %v274
        %v276 = vmul.f32 %v273, 1.442695
        %v277 = vpow.pop %v276
        %v278 = vmax.f32 %v266, 0.0
        %v279 = vmax.f32 %v267, 0.0
        %v280 = vmul.f32 %v266, %v268
        %v281 = vmul.f32 %v267, %v269
        %v282 = vsub.f32 %v278, %v280
        %v283 = vsub.f32 %v279, %v281
        %v284 = vadd.f32 %v275, 1.0
        %v285 = vlog2.pop %v284
        %v286 = vmul.f32 %v285, 0.6931472
        %v287 = vmul.f32 -0.5, %v275
        %v288 = vadd.f32 %v287, 1.0
        %v289 = vmul.f32 %v288, %v275
        %v290 = vand.u32 2147483647, %v275
        %vm291 = vcmp.lt.f32.partialorder %v290, 0.0004427343
        %v292 = vsel %vm291, %v289, %v286
        %v293 = vadd.f32 %v277, 1.0
        %v294 = vlog2.pop %v293
        %v295 = vmul.f32 %v294, 0.6931472
        %v296 = vmul.f32 -0.5, %v277
        %v297 = vadd.f32 %v296, 1.0
        %v298 = vmul.f32 %v297, %v277
        %v299 = vand.u32 2147483647, %v277
        %vm300 = vcmp.lt.f32.partialorder %v299, 0.0004427343
        %v301 = vsel %vm300, %v298, %v295
        %v302 = vadd.f32 %v282, %v292
        %v303 = vadd.f32 %v283, %v301
        %v304 = vadd.f32 %v275, 1.0
        %v305 = vadd.f32 %v277, 1.0
        %v306 = vrcp.pop %v304
        %v307 = vrcp.pop %v305
        %v308 = vmul.f32 %v304, %v306
        %v309 = vmul.f32 %v305, %v307
        %v310 = vsub.f32 2.0, %v308
        %v311 = vsub.f32 2.0, %v309
        %v312 = vmul.f32 %v306, %v310
        %v313 = vmul.f32 %v307, %v311
        %vm314 = vcmp.ge.f32.partialorder %v266, 0.0
        %vm315 = vcmp.ge.f32.partialorder %v267, 0.0
        %v316 = vmul.f32 %v275, %v312
        %v317 = vmul.f32 %v277, %v313
        %v318 = vsel %vm314, %v312, %v316
        %v319 = vsel %vm315, %v313, %v317
        %s320 = sadd.s32 %s27, %s28
        %s321 = smul.u32 %s320, 8
        %v322 = vlaneseq
        %v323 = vshrl.u32 %v322, 7
        %v324 = vstv %s321
        %v325 = vadd.s32 %v324, %v323
        %vm326 = vcmp.lt.s32.totalorder %v325, 8
        %v327 = vsel %vm326, %v302, 0.0
        %v328 = vsel %vm326, %v303, 0.0
        %v329 = vsel %vm326, %v318, 0.0
        %v330 = vsel %vm326, %v319, 0.0
        %v331 = vsel %vm326, %v268, 0.0
        %v332 = vsel %vm326, %v269, 0.0
        %v333 = vld [vmem:[#allocation5] sm:$0xff]
        %v334 = vadd.f32 %v327, %v328
        %335 = vadd.xlane.f32.xlu0 %v334
        %v336 = vpop.xlane.xlu0 %335
        %v337 = vadd.f32 %v333, %v336
        %vm338 = vcmask 7168
        %339 = vst.msk [vmem:[#allocation5] sm:$0xff] %vm338, %v337
        %v340 = vld [vmem:[#allocation2] sm:$0xff]
        %v341 = vmul.f32 %v329, %v331
        %v342 = vmul.f32 %v330, %v332
        %v343 = vadd.f32 %v341, %v342
        %344 = vadd.xlane.f32.xlu0 %v343
        %v345 = vpop.xlane.xlu0 %344
        %v346 = vadd.f32 %v340, %v345
        %347 = vst.msk [vmem:[#allocation2] sm:$0xff] %vm338, %v346
        %v348 = vld [vmem:[#allocation3] sm:$0xff]
        %v349 = vadd.f32 %v329, %v330
        %350 = vadd.xlane.f32.xlu0 %v349
        %v351 = vpop.xlane.xlu0 %350
        %v352 = vadd.f32 %v348, %v351
        %353 = vst.msk [vmem:[#allocation3] sm:$0xff] %vm338, %v352
        %v354 = vld [vmem:[#allocation4] sm:$0xff]
        %v355 = vadd.f32 %v331, %v332
        %356 = vadd.xlane.f32.xlu0 %v355
        %v357 = vpop.xlane.xlu0 %356
        %v358 = vadd.f32 %v354, %v357
        %359 = vst.msk [vmem:[#allocation4] sm:$0xff] %vm338, %v358
        // Predicated region
        $region45: #{tpu_custom_call.1} parent=27 // pred_check
          %p360 = pneg %p252
        $region46: #{tpu_custom_call.1} parent=27 // pred_check_branch
          %362 = sbr.rel (%p360) target = $region48
        $region47: #{tpu_custom_call.1} parent=27 // pred_region
          %v363 = vld [vmem:[#allocation2] sm:$0xff]
          %v364 = vmul.f32 %v363, 2.0
          %v365 = vadd.f32 %v364, 1.0
          %v366 = vld [vmem:[#allocation3] sm:$0xff]
          %v367 = vld [vmem:[#allocation4] sm:$0xff]
          %v368 = vadd.f32 %v366, %v367
          %v369 = vadd.f32 %v368, 1.0
          %v370 = vrcp.pop %v369
          %v371 = vmul.f32 %v365, %v370
          %v372 = vsub.f32 1.0, %v371
          %v373 = vld [vmem:[#allocation5] sm:$0xff]
          %v374 = vsel %vm338, %v373, 0.0
          %375 = vadd.xlane.f32.xlu0 %v374
          %v376 = vpop.xlane.xlu0 %375
          %v377 = vrot.slane %v376, 4
          %v378 = vadd.f32 %v376, %v377
          %v379 = vrot.slane %v378, 2
          %v380 = vadd.f32 %v378, %v379
          %v381 = vrot.slane %v380, 1
          %v382 = vadd.f32 %v380, %v381
          %s383 = vtos %v382
          %v384 = vsel %vm338, %v372, 0.0
          %385 = vadd.xlane.f32.xlu0 %v384
          %v386 = vpop.xlane.xlu0 %385
          %v387 = vrot.slane %v386, 4
          %v388 = vadd.f32 %v386, %v387
          %v389 = vrot.slane %v388, 2
          %v390 = vadd.f32 %v388, %v389
          %v391 = vrot.slane %v390, 1
          %v392 = vadd.f32 %v390, %v391
          %s393 = vtos %v392
          %v394 = vld [vmem:[#allocation6] sm:$0xff]
          %vm395 = vcmp.eq.s32.totalorder %v323, 0
          %v396 = vstv %s383
          %v397 = vsel %vm395, %v396, 0.0
          %vm398 = vcmp.eq.s32.totalorder %v323, 1
          %v399 = vstv %s393
          %v400 = vsel %vm398, %v399, 0.0
          %v401 = vadd.f32 %v397, %v400
          %v402 = vadd.f32 %v394, %v401
          %403 = vst [vmem:[#allocation6] sm:$0xff] %v402
        $region48: #{tpu_custom_call.1} parent=27 // pred_fallthru
          _
        // Predicated region
        $region49: #{tpu_custom_call.1} parent=27 // pred_check
          _
        $region50: #{tpu_custom_call.1} parent=27 // pred_check_branch
          %405 = sbr.rel (%p253) target = $region52
        $region51: #{tpu_custom_call.1} parent=27 // pred_region
          %v406 = vld [vmem:[#allocation6] sm:$0xff]
          %407 = vst [vmem:[%s242] sm:$0xff] %v406
        $region52: #{tpu_custom_call.1} parent=27 // pred_fallthru
          _
        %s408 = sand.u32 %s117, 1
        %s409 = scalar_lea.sflag [#allocation9], %s408
        %s410 = sand.u32 %s117, 1
        %s411 = smul.addr %s410, 8
        %s412 = scalar_lea.vmem [#allocation12], %s411
        // Predicated region
        $region53: #{tpu_custom_call.1} parent=27 // pred_check
          %p413 = pneg %p127
        $region54: #{tpu_custom_call.1} parent=27 // pred_check_branch
          %415 = sbr.rel (%p413) target = $region56
        $region55: #{tpu_custom_call.1} parent=27 // pred_region
          %s417 = ssub.s32 128, 128
          %418 = vsyncadd %s409, %s417
          %s419 = smul.addr %s27, 128
          %s420 = scalar_lea.hbm %s2, %s419
          %s422 = sshll.u32 %s412, 4
          %s423 = int_to_ptr.vmem [resolvable:$true] %s422
          %425 = dma.vmem_to_hbm [thread:$0]  %s423, 128, %s420, %s409
        $region56: #{tpu_custom_call.1} parent=27 // pred_fallthru
          _
      $region28: #{tpu_custom_call.1} parent=5 // pred_fallthru
        _
      %p426 = scmp.le.s32.totalorder 2, %s17
      // Predicated region
      $region57: #{tpu_custom_call.1} parent=5 // pred_check
        %p427 = pneg %p426
      $region58: #{tpu_custom_call.1} parent=5 // pred_check_branch
        %429 = sbr.rel (%p427) target = $region60
      $region59: #{tpu_custom_call.1} parent=5 // pred_region
        %s430 = ssub.s32 %s17, 2
        // Predicated region
        $region61: #{tpu_custom_call.1} parent=59 // pred_check
          %p431 = pneg %p133
        $region62: #{tpu_custom_call.1} parent=59 // pred_check_branch
          %433 = sbr.rel (%p431) target = $region64
        $region63: #{tpu_custom_call.1} parent=59 // pred_region
          %s434 = sand.u32 %s118, 1
          %s435 = scalar_lea.sflag [#allocation9], %s434
          %s436 = sand.u32 %s118, 1
          %s437 = smul.addr %s436, 8
          %s438 = scalar_lea.vmem [#allocation12], %s437
          %439 = dma.done %s435, 128
        $region64: #{tpu_custom_call.1} parent=59 // pred_fallthru
          _
      $region60: #{tpu_custom_call.1} parent=5 // pred_fallthru
        _
    $region6: #{tpu_custom_call.1} parent=1 // loop_footer
      %s21 = sadd.s32 1, %s17
    $region7: #{tpu_custom_call.1} parent=1 // loop_footer_branch
      %16 = sbr.rel target = $region3
    $region8: #{tpu_custom_call.1} parent=1 // loop_exit
      _
    %440 = vsyncpa [#allocation8], 1
    %s441 = scalar_lea.sflag [#allocation8], 1
    %442 = vsyncpa %s441, 1
    %443 = vsyncpa [#allocation11], 1
    %s444 = scalar_lea.sflag [#allocation11], 1
    %445 = vsyncpa %s444, 1
    %446 = vsyncpa [#allocation9], 1
    %s447 = scalar_lea.sflag [#allocation9], 1
    %448 = vsyncpa %s447, 1

</llo_original>
